<compile_context>
chip_gen: v6e
topology: v6e:2x2x1
jax: 0.10.0
libtpu: 0.0.40
codegen_flags: <defaults>
</compile_context>

<pallas_src>
import jax
import jax.numpy as jnp
from jax.experimental import pallas as pl
from jax.experimental.pallas import tpu as pltpu

_LANES = 128


def _round_up(n, m):
    return (n + m - 1) // m * m


# ---------------------------------------------------------------------------
# Single-step cell: one fused matmul (matches SimpleRNNCell.forward).
# ---------------------------------------------------------------------------
def rnn_cell_fused_kernel(xh_ref, w_ref, b_ref, out_ref):
    # (B, I+H) @ (I+H, Hp) -> (B, Hp) on the MXU, f32 accumulate.
    acc = jnp.dot(xh_ref[...], w_ref[...], preferred_element_type=jnp.float32)
    out_ref[...] = jnp.tanh(acc + b_ref[...]).astype(out_ref.dtype)


def prepare_cell_params(w_ih, w_hh, b_ih, b_hh):
    """One-time parameter packing (do NOT call per step).

    Returns:
      w_packed: (I+H, Hp) = [W_ih^T ; W_hh^T], zero-padded along the output dim
      b_packed: (1, Hp)   = b_ih + b_hh, zero-padded
    """
    H, I = w_ih.shape
    Hp = _round_up(H, _LANES)
    w_cat_t = jnp.concatenate([w_ih, w_hh], axis=1).T              # (I+H, H)
    w_packed = jnp.pad(w_cat_t, ((0, 0), (0, Hp - H)))             # (I+H, Hp)
    b_packed = jnp.pad((b_ih + b_hh).reshape(1, H), ((0, 0), (0, Hp - H)))
    return w_packed, b_packed


def simple_rnn_cell_step(x, h_prev, w_packed, b_packed):
    """Hot path: h_new = tanh([x | h] @ w_packed + b_packed)[:, :H]."""
    B, I = x.shape
    H = h_prev.shape[1]
    Hp = w_packed.shape[1]
    xh = jnp.concatenate([x, h_prev], axis=1)                      # (B, I+H)

    out = pl.pallas_call(
        rnn_cell_fused_kernel,
        out_shape=jax.ShapeDtypeStruct((B, Hp), x.dtype),
        grid_spec=pltpu.PrefetchScalarGridSpec(
            num_scalar_prefetch=0,
            grid=(1,),
            in_specs=[
                pl.BlockSpec((B, I + H), lambda i: (0, 0)),
                pl.BlockSpec((I + H, Hp), lambda i: (0, 0)),
                pl.BlockSpec((1, Hp), lambda i: (0, 0)),
            ],
            out_specs=pl.BlockSpec((B, Hp), lambda i: (0, 0)),
        ),
        compiler_params=pltpu.CompilerParams(
            dimension_semantics=("arbitrary",)),
    )(xh, w_packed, b_packed)
    return out[:, :H]


def simple_rnn_cell(x, h_prev, w_ih, w_hh, b_ih, b_hh):
    """Exact equivalent of SimpleRNNCell.forward for a single step."""
    w_packed, b_packed = prepare_cell_params(w_ih, w_hh, b_ih, b_hh)
    return simple_rnn_cell_step(x, h_prev, w_packed, b_packed)


# ---------------------------------------------------------------------------
# Sequence variant: time loop hoisted into the Pallas grid, weights stay
# VMEM-resident, hidden state carried in VMEM scratch.
# ---------------------------------------------------------------------------
def rnn_seq_kernel(xs_ref, h0_ref, wih_ref, whh_ref, b_ref, hs_ref, h_scratch):
    t = pl.program_id(0)

    @pl.when(t == 0)
    def _():
        h_scratch[...] = h0_ref[...].astype(jnp.float32)

    x_t = xs_ref[0]                                                # (B, I)
    pre = jnp.dot(x_t, wih_ref[...], preferred_element_type=jnp.float32)
    pre = pre + jnp.dot(h_scratch[...], whh_ref[...],
                        preferred_element_type=jnp.float32)
    h_new = jnp.tanh(pre + b_ref[...])                             # f32 (B, Hp)
    h_scratch[...] = h_new
    hs_ref[0] = h_new.astype(hs_ref.dtype)


def prepare_seq_params(w_ih, w_hh, b_ih, b_hh):
    """One-time packing for the sequence kernel (pre-transposed + padded)."""
    H, I = w_ih.shape
    Hp = _round_up(H, _LANES)
    wih_t = jnp.pad(w_ih.T, ((0, 0), (0, Hp - H)))                 # (I, Hp)
    whh_t = jnp.pad(w_hh.T, ((0, Hp - H), (0, Hp - H)))            # (Hp, Hp)
    b = jnp.pad((b_ih + b_hh).reshape(1, H), ((0, 0), (0, Hp - H)))
    return wih_t, whh_t, b


def simple_rnn_sequence(xs, h0, w_ih, w_hh, b_ih, b_hh):
    """Applies the RNN cell over xs: (T, B, I).  Returns hs: (T, B, H)."""
    T, B, I = xs.shape
    H = h0.shape[1]
    wih_t, whh_t, b = prepare_seq_params(w_ih, w_hh, b_ih, b_hh)
    Hp = wih_t.shape[1]
    h0p = jnp.pad(h0, ((0, 0), (0, Hp - H)))                       # (B, Hp)

    hs = pl.pallas_call(
        rnn_seq_kernel,
        out_shape=jax.ShapeDtypeStruct((T, B, Hp), xs.dtype),
        grid_spec=pltpu.PrefetchScalarGridSpec(
            num_scalar_prefetch=0,
            grid=(T,),
            in_specs=[
                pl.BlockSpec((1, B, I), lambda t: (t, 0, 0)),      # x_t per step
                pl.BlockSpec((B, Hp), lambda t: (0, 0)),           # h0 (resident)
                pl.BlockSpec((I, Hp), lambda t: (0, 0)),           # W_ih^T (resident)
                pl.BlockSpec((Hp, Hp), lambda t: (0, 0)),          # W_hh^T (resident)
                pl.BlockSpec((1, Hp), lambda t: (0, 0)),           # bias (resident)
            ],
            out_specs=pl.BlockSpec((1, B, Hp), lambda t: (t, 0, 0)),
            scratch_shapes=[pltpu.VMEM((B, Hp), jnp.float32)],     # carried h
        ),
        compiler_params=pltpu.CompilerParams(
            dimension_semantics=("arbitrary",)),                    # recurrence
    )(xs, h0p, wih_t, whh_t, b)
    return hs[:, :, :H]


if __name__ == "__main__":
    # Small shapes consistent with the module: batch=8, input=16, hidden=32, seq=8.
    B, I, H, T = 8, 16, 32, 8
    key = jax.random.PRNGKey(0)
    k_x, k_h, k_wih, k_whh, k_bih, k_bhh, k_xs = jax.random.split(key, 7)

    x = jax.random.normal(k_x, (B, I), dtype=jnp.float32)
    h_prev = jax.random.normal(k_h, (B, H), dtype=jnp.float32)
    xs = jax.random.normal(k_xs, (T, B, I), dtype=jnp.float32)

    # nn.Linear-style init: U(-1/sqrt(fan_in), 1/sqrt(fan_in)).
    bound_ih = 1.0 / (I ** 0.5)
    bound_hh = 1.0 / (H ** 0.5)
    w_ih = jax.random.uniform(k_wih, (H, I), minval=-bound_ih, maxval=bound_ih, dtype=jnp.float32)
    b_ih = jax.random.uniform(k_bih, (H,), minval=-bound_ih, maxval=bound_ih, dtype=jnp.float32)
    w_hh = jax.random.uniform(k_whh, (H, H), minval=-bound_hh, maxval=bound_hh, dtype=jnp.float32)
    b_hh = jax.random.uniform(k_bhh, (H,), minval=-bound_hh, maxval=bound_hh, dtype=jnp.float32)

    # --- single-step cell (matches SimpleRNNCell.forward) ---
    h_new = simple_rnn_cell(x, h_prev, w_ih, w_hh, b_ih, b_hh)
    jax.block_until_ready(h_new)
    ref = jnp.tanh(x @ w_ih.T + b_ih + h_prev @ w_hh.T + b_hh)
    assert jnp.allclose(h_new, ref, atol=1e-5, rtol=1e-5), "cell mismatch vs reference"

    # --- sequence variant (time loop in the grid, weights VMEM-resident) ---
    hs = simple_rnn_sequence(xs, h_prev, w_ih, w_hh, b_ih, b_hh)
    jax.block_until_ready(hs)
    h_ref = h_prev
    for t in range(T):
        h_ref = jnp.tanh(xs[t] @ w_ih.T + b_ih + h_ref @ w_hh.T + b_hh)
        assert jnp.allclose(hs[t], h_ref, atol=1e-4, rtol=1e-4), f"seq mismatch at t={t}"

    print("KERNEL_OK")
</pallas_src>

<mosaic_0001>
module attributes {stable_mosaic.version = 11 : i64} {
  func.func @rnn_cell_fused_kernel(%arg0: i32, %arg1: memref<8x48xf32, #tpu.memory_space<vmem>>, %arg2: memref<48x128xf32, #tpu.memory_space<vmem>>, %arg3: memref<1x128xf32, #tpu.memory_space<vmem>>, %arg4: memref<8x128xf32, #tpu.memory_space<vmem>>) attributes {dimension_semantics = [#tpu.dimension_semantics<arbitrary>], iteration_bounds = array<i64: 1>, scalar_prefetch = 0 : i64, scratch_operands = 0 : i64, tpu.core_type = #tpu.core_type<tc>, window_params = [{pipeline_mode = #tpu.pipeline_mode<synchronous>, transform_indices = @transform_0, window_bounds = array<i64: 8, 48>}, {pipeline_mode = #tpu.pipeline_mode<synchronous>, transform_indices = @transform_1, window_bounds = array<i64: 48, 128>}, {pipeline_mode = #tpu.pipeline_mode<synchronous>, transform_indices = @transform_2, window_bounds = array<i64: 1, 128>}, {pipeline_mode = #tpu.pipeline_mode<synchronous>, transform_indices = @transform_3, window_bounds = array<i64: 8, 128>}]} {
    %c0 = arith.constant 0 : index
    %c0_0 = arith.constant 0 : index
    %0 = vector.load %arg1[%c0, %c0_0] : memref<8x48xf32, #tpu.memory_space<vmem>>, vector<8x48xf32>
    %c0_1 = arith.constant 0 : index
    %c0_2 = arith.constant 0 : index
    %1 = vector.load %arg2[%c0_1, %c0_2] : memref<48x128xf32, #tpu.memory_space<vmem>>, vector<48x128xf32>
    %cst = arith.constant dense<0.000000e+00> : vector<8x128xf32>
    %2 = tpu.matmul %0, %1, %cst {dimension_numbers = #tpu.dot_dimension_numbers<[1], [0], [0], [1], [0, 0, 1, 1], [], []>} : vector<8x48xf32>, vector<48x128xf32>, vector<8x128xf32> -> vector<8x128xf32>
    %c0_3 = arith.constant 0 : index
    %c0_4 = arith.constant 0 : index
    %3 = vector.load %arg3[%c0_3, %c0_4] : memref<1x128xf32, #tpu.memory_space<vmem>>, vector<1x128xf32>
    %4 = vector.broadcast %3 : vector<1x128xf32> to vector<8x128xf32>
    %5 = arith.addf %2, %4 : vector<8x128xf32>
    %6 = math.tanh %5 : vector<8x128xf32>
    %c0_5 = arith.constant 0 : index
    %c0_6 = arith.constant 0 : index
    %7 = vector.load %arg4[%c0_5, %c0_6] : memref<8x128xf32, #tpu.memory_space<vmem>>, vector<8x128xf32>
    tpu.vector_store %arg4[%c0_5, %c0_6], %6 {strides = array<i32>} : memref<8x128xf32, #tpu.memory_space<vmem>>, vector<8x128xf32>,
    return
  }
  func.func @transform_0(%arg0: i32) -> (i32, i32) {
    %c0_i32 = arith.constant 0 : i32
    %c0_i32_0 = arith.constant 0 : i32
    %c0_i32_1 = arith.constant 0 : i32
    return %c0_i32, %c0_i32_0 : i32, i32
  }
  func.func @transform_1(%arg0: i32) -> (i32, i32) {
    %c0_i32 = arith.constant 0 : i32
    %c0_i32_0 = arith.constant 0 : i32
    %c0_i32_1 = arith.constant 0 : i32
    return %c0_i32, %c0_i32_0 : i32, i32
  }
  func.func @transform_2(%arg0: i32) -> (i32, i32) {
    %c0_i32 = arith.constant 0 : i32
    %c0_i32_0 = arith.constant 0 : i32
    %c0_i32_1 = arith.constant 0 : i32
    return %c0_i32, %c0_i32_0 : i32, i32
  }
  func.func @transform_3(%arg0: i32) -> (i32, i32) {
    %c0_i32 = arith.constant 0 : i32
    %c0_i32_0 = arith.constant 0 : i32
    %c0_i32_1 = arith.constant 0 : i32
    return %c0_i32, %c0_i32_0 : i32, i32
  }
}

</mosaic_0001>

<llo_original>
// kernel: tpu_custom_call.1
$region0: #{tpu_custom_call.1}
  #allocation0 [shape = 'u32[]', space=smem, size = 0x4, offset = 0x4, fixed_abs, tag = 'smem constant byte address 0x4 - core index']
  #allocation1 [shape = 'u32[144,128]{1,0:T(1,128)}', space=vmem, size = 0x12000, scoped, tag = 'internal scratch']
  %s0 = inlined_call_operand.hbm [shape: f32[8,48], index: 0, kind: input, shape index: {}]
  %s1 = inlined_call_operand.hbm [shape: f32[48,128], index: 1, kind: input, shape index: {}]
  %s2 = inlined_call_operand.vmem [shape: f32[1,128], index: 2, kind: input, shape index: {}]
  %s3 = inlined_call_operand.hbm [shape: f32[8,128], index: 3, kind: output, shape index: {}]
  %s4 = sld [smem:[#allocation0]]
  $region30: #{tpu_custom_call.1} parent=0
    _
  %s6 = ssub.s32 1, %s4
  %s7 = scalar_select 0, %s6, %s4
  $region1: #{tpu_custom_call.1} parent=0
    #allocation2 [shape = 'u8[4096]{0}', space=vmem, size = 0x1000, scoped, tag = 'input window, operand 0, single buffered']
    #allocation3 [shape = 's32[1]{0}', space=sflag, size = 0x4, scoped, tag = 'scoped memory for tpu_custom_call.1']
    #allocation4 [shape = 's32[1]{0}', space=sflag, size = 0x4, scoped, tag = 'scoped memory for tpu_custom_call.1']
    #allocation5 [shape = 'u8[24576]{0}', space=vmem, size = 0x6000, scoped, tag = 'input window, operand 1, single buffered']
    #allocation6 [shape = 's32[1]{0}', space=sflag, size = 0x4, scoped, tag = 'scoped memory for tpu_custom_call.1']
    #allocation7 [shape = 'u8[4096]{0}', space=vmem, size = 0x1000, scoped, tag = 'output window, operand 0, single buffered']
    %8 = vsyncpa [#allocation3], 0
    %9 = vsyncpa [#allocation6], 0
    %10 = vsyncpa [#allocation4], 0
    // Predicated region
    $region2: #{tpu_custom_call.1} parent=1 // pred_check
      _
    $region3: #{tpu_custom_call.1} parent=1 // pred_check_branch
      %12 = sbr.rel (0) target = $region5
    $region4: #{tpu_custom_call.1} parent=1 // pred_region
      %s14 = ssub.s32 128, 128
      %15 = vsyncadd [#allocation3], %s14
      %s17 = sshll.u32 [#allocation2], 4
      %s18 = int_to_ptr.vmem [resolvable:$true] %s17
      %20 = dma.hbm_to_vmem [thread:$0]  %s0, 128, %s18, [#allocation3]
    $region5: #{tpu_custom_call.1} parent=1 // pred_fallthru
      _
    // Predicated region
    $region6: #{tpu_custom_call.1} parent=1 // pred_check
      _
    $region7: #{tpu_custom_call.1} parent=1 // pred_check_branch
      %22 = sbr.rel (0) target = $region9
    $region8: #{tpu_custom_call.1} parent=1 // pred_region
      %s24 = ssub.s32 768, 768
      %25 = vsyncadd [#allocation6], %s24
      %s26 = sshll.u32 [#allocation5], 4
      %s27 = int_to_ptr.vmem [resolvable:$true] %s26
      %32 = dma.hbm_to_vmem [thread:$0]  %s1, 768, %s27, [#allocation6], 128, 128, 8
    $region9: #{tpu_custom_call.1} parent=1 // pred_fallthru
      _
    // Predicated region
    $region10: #{tpu_custom_call.1} parent=1 // pred_check
      _
    $region11: #{tpu_custom_call.1} parent=1 // pred_check_branch
      %34 = sbr.rel (0) target = $region13
    $region12: #{tpu_custom_call.1} parent=1 // pred_region
      _
    $region13: #{tpu_custom_call.1} parent=1 // pred_fallthru
      _
    // Predicated region
    $region14: #{tpu_custom_call.1} parent=1 // pred_check
      _
    $region15: #{tpu_custom_call.1} parent=1 // pred_check_branch
      %36 = sbr.rel (0) target = $region17
    $region16: #{tpu_custom_call.1} parent=1 // pred_region
      %37 = dma.done [#allocation3], 128
    $region17: #{tpu_custom_call.1} parent=1 // pred_fallthru
      _
    // Predicated region
    $region18: #{tpu_custom_call.1} parent=1 // pred_check
      _
    $region19: #{tpu_custom_call.1} parent=1 // pred_check_branch
      %39 = sbr.rel (0) target = $region21
    $region20: #{tpu_custom_call.1} parent=1 // pred_region
      %40 = dma.done [#allocation6], 768
    $region21: #{tpu_custom_call.1} parent=1 // pred_fallthru
      _
    %v41 = vld [vmem:[#allocation2] sm:$0xff]
    %v42 = vld [vmem:[#allocation5] sm:$0xff]
    %v43 = vld [vmem:[#allocation5 + $0x8] sm:$0xff]
    %v44 = vld [vmem:[#allocation5 + $0x10] sm:$0xff]
    %v45 = vld [vmem:[#allocation5 + $0x18] sm:$0xff]
    %v46 = vld [vmem:[#allocation5 + $0x20] sm:$0xff]
    %v47 = vld [vmem:[#allocation5 + $0x28] sm:$0xff]
    %v48 = vld [vmem:[%s2] sm:$0x1]
    %v50 = vlaneseq
    %v51 = vshrl.u32 %v50, 7
    %v52 = vsub.s32 0, %v51
    %v53 = vrot.slane %v48, %v52
    %vm55 = vcmask 392192
    %v57 = vsel %vm55, %v41, 0
    %59 = vmatprep.subr.mxu0 0.0
    %60 = vmatpush1.msra.mxu0 0.0
    %61 = vmatprep.subr.mxu0 0.0
    %62 = vmatpush1.msra.mxu0 0.0
    %63 = vmatprep.subr.mxu0 0.0
    %64 = vmatpush1.msra.mxu0 0.0
    %65 = vmatprep.subr.mxu0 0.0
    %66 = vmatpush1.msra.mxu0 0.0
    %67 = vmatprep.subr.mxu0 0.0
    %68 = vmatpush1.msra.mxu0 0.0
    %69 = vmatprep.subr.mxu0 0.0
    %70 = vmatpush1.msra.mxu0 0.0
    %71 = vmatprep.subr.mxu0 0.0
    %72 = vmatpush1.msra.mxu0 0.0
    %73 = vmatprep.subr.mxu0 0.0
    %74 = vmatpush1.msra.mxu0 0.0
    %75 = vmatprep.subr.mxu0 0.0
    %76 = vmatpush1.msra.mxu0 0.0
    %77 = vmatprep.subr.mxu0 0.0
    %78 = vmatpush1.msra.mxu0 0.0
    %79 = vmatprep.subr.mxu0 0.0
    %80 = vmatpush1.msra.mxu0 %v47
    %81 = vmatprep.subr.mxu0 0.0
    %82 = vmatpush1.msra.mxu0 %v46
    %83 = vmatprep.subr.mxu0 0.0
    %84 = vmatpush1.msra.mxu0 %v45
    %85 = vmatprep.subr.mxu0 0.0
    %86 = vmatpush1.msra.mxu0 %v44
    %87 = vmatprep.subr.mxu0 0.0
    %88 = vmatpush1.msra.mxu0 %v43
    %89 = vmatprep.subr.mxu0 0.0
    %90 = vmatpush1.msra.mxu0 %v42
    %91 = vmatprep.subr.mxu0 0.0
    %92 = vmatpush2.msra.mxu0 0.0
    %93 = vmatprep.subr.mxu0 0.0
    %94 = vmatpush2.msra.mxu0 0.0
    %95 = vmatprep.subr.mxu0 0.0
    %96 = vmatpush2.msra.mxu0 0.0
    %97 = vmatprep.subr.mxu0 0.0
    %98 = vmatpush2.msra.mxu0 0.0
    %99 = vmatprep.subr.mxu0 0.0
    %100 = vmatpush2.msra.mxu0 0.0
    %101 = vmatprep.subr.mxu0 0.0
    %102 = vmatpush2.msra.mxu0 0.0
    %103 = vmatprep.subr.mxu0 0.0
    %104 = vmatpush2.msra.mxu0 0.0
    %105 = vmatprep.subr.mxu0 0.0
    %106 = vmatpush2.msra.mxu0 0.0
    %107 = vmatprep.subr.mxu0 0.0
    %108 = vmatpush2.msra.mxu0 0.0
    %109 = vmatprep.subr.mxu0 0.0
    %110 = vmatpush2.msra.mxu0 0.0
    %111 = vmatprep.subr.mxu0 0.0
    %112 = vmatpush2.msra.mxu0 0.0
    %113 = vmatprep.subr.mxu0 0.0
    %114 = vmatpush2.msra.mxu0 0.0
    %115 = vmatprep.subr.mxu0 0.0
    %116 = vmatpush2.msra.mxu0 0.0
    %117 = vmatprep.subr.mxu0 0.0
    %118 = vmatpush2.msra.mxu0 0.0
    %119 = vmatprep.subr.mxu0 0.0
    %120 = vmatpush2.msra.mxu0 0.0
    %121 = vmatprep.subr.mxu0 0.0
    %122 = vmatpush2.msra.mxu0 0.0
    %123 = vmatprep.mubr.f32.mxu0 0.0
    %124 = vmatmul.mubr.f32.gmra.mxu0 %v57
    %v125 = vpop.f32.mrf.mxu0
    %v126 = vadd.f32 %v53, %v125
    %v127 = vpop.f32.mrf.mxu0
    %128 = vdwg.mxu0
    %v129 = vtanh.pop %v126
    %130 = vst [vmem:[#allocation7] sm:$0xff] %v129
    // Predicated region
    $region22: #{tpu_custom_call.1} parent=1 // pred_check
      _
    $region23: #{tpu_custom_call.1} parent=1 // pred_check_branch
      %132 = sbr.rel (0) target = $region25
    $region24: #{tpu_custom_call.1} parent=1 // pred_region
      %s134 = ssub.s32 128, 128
      %135 = vsyncadd [#allocation4], %s134
      %s137 = sshll.u32 [#allocation7], 4
      %s138 = int_to_ptr.vmem [resolvable:$true] %s137
      %140 = dma.vmem_to_hbm [thread:$0]  %s138, 128, %s3, [#allocation4]
    $region25: #{tpu_custom_call.1} parent=1 // pred_fallthru
      _
    // Predicated region
    $region26: #{tpu_custom_call.1} parent=1 // pred_check
      _
    $region27: #{tpu_custom_call.1} parent=1 // pred_check_branch
      %142 = sbr.rel (0) target = $region29
    $region28: #{tpu_custom_call.1} parent=1 // pred_region
      %143 = dma.done [#allocation4], 128
    $region29: #{tpu_custom_call.1} parent=1 // pred_fallthru
      _
    %144 = vsyncpa [#allocation3], 1
    %145 = vsyncpa [#allocation6], 1
    %146 = vsyncpa [#allocation4], 1

</llo_original>
